<compile_context>
chip_gen: v5e
topology: v5e:2x2
jax: 0.10.0
libtpu: 0.0.40
codegen_flags: <defaults>
</compile_context>

<pallas_src>
import functools

import jax
import jax.numpy as jnp
from jax.experimental import pallas as pl
from jax.experimental.pallas import tpu as pltpu

LANES = 128
TARGET_TILE_BYTES = 8 * 1024 * 1024      # ~8 MiB of input (native dtype) per grid step
VMEM_LIMIT_BYTES = 48 * 1024 * 1024      # explicit scoped-VMEM budget (< v7x 64 MiB physical)
SUBLANE_PACK = {4: 8, 2: 16, 1: 32}      # packed-sublane multiple per dtype itemsize


def _round_up(v, m):
    return (v + m - 1) // m * m


def _mean_kernel(x_ref, o_ref, *, tile_rows, steps_per_core, steps_total,
                 tail_valid_rows, has_row_tail, has_grid_excess):
    c = pl.program_id(0)                 # TensorCore shard ("parallel" axis)
    i = pl.program_id(1)                 # per-core reduction step ("arbitrary" axis)
    logical_blk = c * steps_per_core + i

    @pl.when(i == 0)
    def _init():
        o_ref[...] = jnp.zeros_like(o_ref)

    def _fold(v):
        # (r, LANES) native dtype -> (8, LANES) f32 partial sum; r % 8 == 0.
        r = v.shape[0]
        return jnp.sum(v.astype(jnp.float32).reshape(r // 8, 8, LANES), axis=0)

    def _full_block():
        o_ref[...] += _fold(x_ref[...])[None]

    def _tail_block():
        acc = jnp.zeros((8, LANES), jnp.float32)
        full8 = (tail_valid_rows // 8) * 8
        if full8 > 0:
            acc = acc + _fold(x_ref[:full8, :])
        rem = tail_valid_rows - full8
        if rem > 0:
            chunk = x_ref[full8:full8 + 8, :].astype(jnp.float32)
            rid = jax.lax.broadcasted_iota(jnp.int32, (8, LANES), 0)
            # select (not multiply) so garbage/NaN in the OOB rows never propagates
            acc = acc + jnp.where(rid < rem, chunk, 0.0)
        o_ref[...] += acc[None]

    if not has_row_tail and not has_grid_excess:
        # Steady state: pure unmasked fold, no iota/select VALU work.
        _full_block()
    else:
        full_cutoff = steps_total - 1 if has_row_tail else steps_total

        @pl.when(logical_blk < full_cutoff)
        def _():
            _full_block()

        if has_row_tail:
            @pl.when(logical_blk == steps_total - 1)
            def _():
                _tail_block()
        # logical blocks >= steps_total (uneven 2-core split) contribute nothing.


def pallas_mean(x, *, target_tile_bytes=TARGET_TILE_BYTES):
    """Global mean of x (any shape), matching torch.mean(x) forward semantics."""
    n = x.size
    itemsize = x.dtype.itemsize
    sub = SUBLANE_PACK.get(itemsize, 8)

    flat = jnp.ravel(x)                  # free for a contiguous array
    pad = (-n) % LANES
    if pad:
        # Fallback only for non-lane-aligned element counts (zeros don't change the sum).
        flat = jnp.pad(flat, (0, pad))
    mat = flat.reshape(-1, LANES)        # pure reshape, no data movement
    rows = mat.shape[0]

    target_rows = max(sub, (target_tile_bytes // (LANES * itemsize)) // sub * sub)
    tile_rows = min(target_rows, _round_up(rows, sub))

    steps_total = pl.cdiv(rows, tile_rows)
    num_cores = 2 if steps_total >= 2 else 1          # shard across TCs (v7x); no-op on 1-TC chips
    steps_per_core = pl.cdiv(steps_total, num_cores)

    has_row_tail = (rows % tile_rows) != 0
    has_grid_excess = (num_cores * steps_per_core) != steps_total
    tail_valid_rows = rows - (steps_total - 1) * tile_rows

    if has_grid_excess:
        def in_map(c, i):
            return (jnp.minimum(c * steps_per_core + i, steps_total - 1), 0)
    else:
        def in_map(c, i):
            return (c * steps_per_core + i, 0)

    out_dtype = x.dtype if jnp.issubdtype(x.dtype, jnp.floating) else jnp.float32

    partials = pl.pallas_call(
        functools.partial(
            _mean_kernel,
            tile_rows=tile_rows,
            steps_per_core=steps_per_core,
            steps_total=steps_total,
            tail_valid_rows=tail_valid_rows,
            has_row_tail=has_row_tail,
            has_grid_excess=has_grid_excess,
        ),
        out_shape=jax.ShapeDtypeStruct((num_cores, 8, LANES), jnp.float32),
        grid_spec=pltpu.PrefetchScalarGridSpec(
            num_scalar_prefetch=0,
            grid=(num_cores, steps_per_core),
            in_specs=[pl.BlockSpec((tile_rows, LANES), in_map)],
            out_specs=pl.BlockSpec((1, 8, LANES), lambda c, i: (c, 0, 0)),
        ),
        compiler_params=pltpu.CompilerParams(
            dimension_semantics=("parallel", "arbitrary"),
            vmem_limit_bytes=VMEM_LIMIT_BYTES,
        ),
        cost_estimate=pl.CostEstimate(
            flops=int(n),
            transcendentals=0,
            bytes_accessed=int(n) * int(itemsize) + num_cores * 8 * LANES * 4,
        ),
    )(mat)

    # Tiny final cross-lane reduce + divide-by-N outside the kernel.
    return (jnp.sum(partials) / float(n)).astype(out_dtype)


if __name__ == "__main__":
    key = jax.random.PRNGKey(0)
    k1, k2, k3 = jax.random.split(key, 3)

    # Primary test: shape implied by the module's intended NCHW input.
    x = jax.random.normal(k1, (2, 4, 16, 16), dtype=jnp.float32)
    result = jax.block_until_ready(pallas_mean(x))
    expected = jnp.mean(x)
    assert result.shape == (), f"expected scalar, got {result.shape}"
    assert jnp.allclose(result, expected, atol=1e-6, rtol=1e-6), (
        f"mismatch: {result} vs {expected}"
    )

    # Non-lane-aligned element count exercises the in-kernel tail path.
    x2 = jax.random.normal(k2, (3, 5, 7, 11), dtype=jnp.float32)
    result2 = jax.block_until_ready(pallas_mean(x2))
    expected2 = jnp.mean(x2)
    assert jnp.allclose(result2, expected2, atol=1e-6, rtol=1e-6), (
        f"mismatch (tail case): {result2} vs {expected2}"
    )

    # Force a tiny tile so the multi-step / 2-core split / excess-block / row-tail
    # code paths are all compiled and checked even at a small test size.
    x3 = jax.random.normal(k3, (4786,), dtype=jnp.float32)
    result3 = jax.block_until_ready(pallas_mean(x3, target_tile_bytes=4096))
    expected3 = jnp.mean(x3)
    assert jnp.allclose(result3, expected3, atol=1e-5, rtol=1e-5), (
        f"mismatch (multi-core/grid-excess case): {result3} vs {expected3}"
    )

    print("KERNEL_OK")
</pallas_src>

<mosaic_0001>
module attributes {stable_mosaic.version = 11 : i64} {
  func.func @_mean_kernel(%arg0: i32, %arg1: i32, %arg2: memref<16x128xf32, #tpu.memory_space<vmem>>, %arg3: memref<1x8x128xf32, #tpu.memory_space<vmem>>) attributes {dimension_semantics = [#tpu.dimension_semantics<parallel>, #tpu.dimension_semantics<arbitrary>], iteration_bounds = array<i64: 1, 1>, scalar_prefetch = 0 : i64, scratch_operands = 0 : i64, tpu.core_type = #tpu.core_type<tc>, window_params = [{transform_indices = @transform_0, window_bounds = array<i64: 16, 128>}, {transform_indices = @transform_1, window_bounds = array<i64: 1, 8, 128>}]} {
    %c0_i32 = arith.constant 0 : i32
    %0 = arith.cmpi eq, %arg1, %c0_i32 : i32
    %1 = arith.extui %0 : i1 to i32
    %c0_i32_0 = arith.constant 0 : i32
    %2 = arith.cmpi ne, %1, %c0_i32_0 : i32
    scf.if %2 {
      %cst_8 = arith.constant 0.000000e+00 : f32
      %10 = vector.broadcast %cst_8 : f32 to vector<1x8x128xf32>
      %c0_9 = arith.constant 0 : index
      %c0_10 = arith.constant 0 : index
      %c0_11 = arith.constant 0 : index
      %11 = vector.load %arg3[%c0_9, %c0_10, %c0_11] : memref<1x8x128xf32, #tpu.memory_space<vmem>>, vector<1x8x128xf32>
      tpu.vector_store %arg3[%c0_9, %c0_10, %c0_11], %10 {strides = array<i32>} : memref<1x8x128xf32, #tpu.memory_space<vmem>>, vector<1x8x128xf32>,
    } else {
    }
    %c0 = arith.constant 0 : index
    %c0_1 = arith.constant 0 : index
    %c0_2 = arith.constant 0 : index
    %3 = vector.load %arg3[%c0, %c0_1, %c0_2] : memref<1x8x128xf32, #tpu.memory_space<vmem>>, vector<1x8x128xf32>
    %c0_3 = arith.constant 0 : index
    %c0_4 = arith.constant 0 : index
    %4 = vector.load %arg2[%c0_3, %c0_4] : memref<16x128xf32, #tpu.memory_space<vmem>>, vector<16x128xf32>
    %5 = vector.shape_cast %4 : vector<16x128xf32> to vector<2x8x128xf32>
    %cst = arith.constant dense<0.000000e+00> : vector<8x128xf32>
    %6 = vector.multi_reduction <add>, %5, %cst [0] : vector<2x8x128xf32> to vector<8x128xf32>
    %7 = vector.shape_cast %6 : vector<8x128xf32> to vector<1x8x128xf32>
    %8 = arith.addf %3, %7 : vector<1x8x128xf32>
    %c0_5 = arith.constant 0 : index
    %c0_6 = arith.constant 0 : index
    %c0_7 = arith.constant 0 : index
    %9 = vector.load %arg3[%c0_5, %c0_6, %c0_7] : memref<1x8x128xf32, #tpu.memory_space<vmem>>, vector<1x8x128xf32>
    tpu.vector_store %arg3[%c0_5, %c0_6, %c0_7], %8 {strides = array<i32>} : memref<1x8x128xf32, #tpu.memory_space<vmem>>, vector<1x8x128xf32>,
    return
  }
  func.func @transform_0(%arg0: i32, %arg1: i32) -> (i32, i32) {
    %c1_i32 = arith.constant 1 : i32
    %0 = arith.muli %arg0, %c1_i32 : i32
    %1 = arith.addi %0, %arg1 : i32
    %c0_i32 = arith.constant 0 : i32
    %c0_i32_0 = arith.constant 0 : i32
    return %1, %c0_i32 : i32, i32
  }
  func.func @transform_1(%arg0: i32, %arg1: i32) -> (i32, i32, i32) {
    %c0_i32 = arith.constant 0 : i32
    %c0_i32_0 = arith.constant 0 : i32
    %c0_i32_1 = arith.constant 0 : i32
    return %arg0, %c0_i32, %c0_i32_0 : i32, i32, i32
  }
}

</mosaic_0001>

<llo_original>
// kernel: tpu_custom_call.1
$region0: #{tpu_custom_call.1}
  #allocation0 [shape = 'u32[]', space=smem, size = 0x4, offset = 0x4, fixed_abs, tag = 'smem constant byte address 0x4 - core index']
  #allocation1 [shape = 'u32[72,128]{1,0:T(1,128)}', space=vmem, size = 0x9000, scoped, tag = 'internal scratch']
  %s0 = inlined_call_operand.hbm [shape: f32[16,128], index: 0, kind: input, shape index: {}]
  %s1 = inlined_call_operand.hbm [shape: f32[1,8,128], index: 1, kind: output, shape index: {}]
  %s2 = sld [smem:[#allocation0]]
  $region22: #{tpu_custom_call.1} parent=0
    _
  %s4 = ssub.s32 1, %s2
  %s5 = scalar_select 0, %s4, %s2
  $region1: #{tpu_custom_call.1} parent=0
    #allocation2 [shape = 'u8[8192]{0}', space=vmem, size = 0x2000, scoped, tag = 'input window, operand 0, single buffered']
    #allocation3 [shape = 's32[1]{0}', space=sflag, size = 0x4, scoped, tag = 'scoped memory for tpu_custom_call.1']
    #allocation4 [shape = 's32[1]{0}', space=sflag, size = 0x4, scoped, tag = 'scoped memory for tpu_custom_call.1']
    #allocation5 [shape = 'u8[4096]{0}', space=vmem, size = 0x1000, scoped, tag = 'output window, operand 0, single buffered']
    %6 = vsyncpa [#allocation3], 0
    %7 = vsyncpa [#allocation4], 0
    // Predicated region
    $region2: #{tpu_custom_call.1} parent=1 // pred_check
      _
    $region3: #{tpu_custom_call.1} parent=1 // pred_check_branch
      %9 = sbr.rel (0) target = $region5
    $region4: #{tpu_custom_call.1} parent=1 // pred_region
      %s10 = sadd.s32 0, 0
      %s11 = smul.u32 2, %s10
      %13 = vsyncadd [#allocation3], 0
      %s14 = smul.addr %s11, 8
      %s15 = scalar_lea.hbm %s0, %s14
      %s16 = sshll.u32 %s15, 4
      %s17 = int_to_ptr.hbm [resolvable:$true] %s16
      %s18 = sshll.u32 [#allocation2], 4
      %s19 = int_to_ptr.vmem [resolvable:$true] %s18
      %24 = dma.hbm_to_vmem [thread:$0]  %s17, 256, %s19, [#allocation3], 128, 128, 8
    $region5: #{tpu_custom_call.1} parent=1 // pred_fallthru
      _
    // Predicated region
    $region6: #{tpu_custom_call.1} parent=1 // pred_check
      _
    $region7: #{tpu_custom_call.1} parent=1 // pred_check_branch
      %26 = sbr.rel (0) target = $region9
    $region8: #{tpu_custom_call.1} parent=1 // pred_region
      %28 = dma.done [#allocation3], 256
    $region9: #{tpu_custom_call.1} parent=1 // pred_fallthru
      _
    %s29 = sadd.s32 0, 0
    %s30 = smul.u32 2, %s29
    %p31 = scmp.eq.s32.totalorder 0, 0
    // Predicated region
    $region10: #{tpu_custom_call.1} parent=1 // pred_check
      %p32 = pneg %p31
    $region11: #{tpu_custom_call.1} parent=1 // pred_check_branch
      %34 = sbr.rel (%p32) target = $region13
    $region12: #{tpu_custom_call.1} parent=1 // pred_region
      %35 = vst [vmem:[#allocation5] sm:$0xff] 0.0
    $region13: #{tpu_custom_call.1} parent=1 // pred_fallthru
      _
    %v36 = vld [vmem:[#allocation5] sm:$0xff]
    %v37 = vld [vmem:[#allocation2] sm:$0xff]
    %v38 = vld [vmem:[#allocation2 + $0x8] sm:$0xff]
    %v39 = vadd.f32 %v37, %v38
    %v40 = vadd.f32 %v36, %v39
    %41 = vst [vmem:[#allocation5] sm:$0xff] %v40
    // Predicated region
    $region14: #{tpu_custom_call.1} parent=1 // pred_check
      _
    $region15: #{tpu_custom_call.1} parent=1 // pred_check_branch
      %43 = sbr.rel (0) target = $region17
    $region16: #{tpu_custom_call.1} parent=1 // pred_region
      %45 = vsyncadd [#allocation4], 0
      %s47 = sshll.u32 [#allocation5], 4
      %s48 = int_to_ptr.vmem [resolvable:$true] %s47
      %s49 = sshll.u32 %s1, 4
      %s50 = int_to_ptr.hbm [resolvable:$true] %s49
      %52 = dma.vmem_to_hbm [thread:$0]  %s48, 128, %s50, [#allocation4]
    $region17: #{tpu_custom_call.1} parent=1 // pred_fallthru
      _
    // Predicated region
    $region18: #{tpu_custom_call.1} parent=1 // pred_check
      _
    $region19: #{tpu_custom_call.1} parent=1 // pred_check_branch
      %54 = sbr.rel (0) target = $region21
    $region20: #{tpu_custom_call.1} parent=1 // pred_region
      %56 = dma.done [#allocation4], 128
    $region21: #{tpu_custom_call.1} parent=1 // pred_fallthru
      _
    %57 = vsyncpa [#allocation3], 1
    %58 = vsyncpa [#allocation4], 1

</llo_original>
